<compile_context>
chip_gen: v7x
topology: tpu7x:2x2x1
jax: 0.10.0
libtpu: 0.0.40
codegen_flags: <defaults>
</compile_context>

<pallas_src>
import functools

import jax
import jax.numpy as jnp
from jax.experimental import pallas as pl
from jax.experimental.pallas import tpu as pltpu

_LANES = 128
_ACC_ROWS = 32                     # accumulator height: 4 f32 vregs -> 4 chains
_CHUNK_ROWS = 512                  # rows per inner streaming chunk (256 KiB f32)
_MAX_BLOCK_BYTES = 4 * 1024 * 1024 # per pipeline buffer per input (~4 MiB)
_NUM_PARALLEL = 2                  # leading "parallel" axis (v7x: 2 TensorCores)


def _round_up(x, m):
    return ((x + m - 1) // m) * m


def _sse_partial_kernel(pred_ref, target_ref, acc_ref, *, rows, block_rows,
                        blocks_per_chunk, chunk_rows, any_ragged):
    """Accumulates lane-wise partial sum-of-squared-errors into acc_ref."""
    c = pl.program_id(0)   # parallel chunk (TensorCore on v7x)
    i = pl.program_id(1)   # block within chunk (running reduction)

    @pl.when(i == 0)
    def _init():
        acc_ref[...] = jnp.zeros_like(acc_ref)

    def _accumulate(valid_rows):
        # valid_rows: None -> no masking (full block); else traced row count.
        n_chunks = block_rows // chunk_rows

        def body(j, carry):
            off = pl.multiple_of(j * chunk_rows, chunk_rows)
            p = pred_ref[pl.ds(off, chunk_rows), :].astype(jnp.float32)
            t = target_ref[pl.ds(off, chunk_rows), :].astype(jnp.float32)
            d = p - t
            sq = d * d
            if valid_rows is not None:
                # Select (not multiply) so unspecified OOB padding / NaNs in the
                # ragged edge of the block can never leak into the sum.
                row = off + jax.lax.broadcasted_iota(jnp.int32, sq.shape, 0)
                sq = jnp.where(row < valid_rows, sq, 0.0)
            part = jnp.sum(
                sq.reshape(chunk_rows // _ACC_ROWS, _ACC_ROWS, _LANES), axis=0)
            acc_ref[...] += part[None, :, :]
            return carry

        jax.lax.fori_loop(0, n_chunks, body, 0, unroll=True)

    if not any_ragged:
        _accumulate(None)
    else:
        blk = c * blocks_per_chunk + i            # logical (unclamped) block id
        full_blocks = rows // block_rows          # static python int
        needs_mask = blk >= full_blocks

        @pl.when(jnp.logical_not(needs_mask))
        def _fast():
            _accumulate(None)

        @pl.when(needs_mask)
        def _tail():
            # Ragged last block (partial rows) or overflow block of the uneven
            # parallel split (valid_rows <= 0 -> contributes exactly zero).
            _accumulate(rows - blk * block_rows)


def scaled_psnr_loss(pred, target, *, max_val=2.0, min_db=0.0, max_db=40.0):
    """JAX/Pallas equivalent of ScaledPSNRLoss()(pred, target). Returns scalar f32."""
    assert pred.shape == target.shape, "pred/target shape mismatch"
    assert pred.dtype == target.dtype, "pred/target dtype mismatch"
    total = int(pred.size)

    # Flatten (free reshape).  Pad only the lane tail when needed; padded zeros
    # add nothing to the SSE and the mean divides by the true `total`.
    p_flat = pred.reshape(-1)
    t_flat = target.reshape(-1)
    pad = (-total) % _LANES
    if pad:
        # TODO(synk): avoid this HBM copy by masking the lane tail in-kernel.
        p_flat = jnp.pad(p_flat, (0, pad))
        t_flat = jnp.pad(t_flat, (0, pad))
    rows = (total + pad) // _LANES
    p2 = p_flat.reshape(rows, _LANES)
    t2 = t_flat.reshape(rows, _LANES)

    # --- block sizing: by bytes, aligned to the accumulator / chunk heights ---
    itemsize = jnp.dtype(pred.dtype).itemsize
    max_block_rows = _MAX_BLOCK_BYTES // (_LANES * itemsize)   # 8192 f32 / 16384 bf16
    rows_per_chunk_target = pl.cdiv(rows, _NUM_PARALLEL)
    block_rows = min(max_block_rows, _round_up(rows_per_chunk_target, _ACC_ROWS))
    if block_rows >= _CHUNK_ROWS:
        block_rows = _round_up(block_rows, _CHUNK_ROWS)        # still <= max (512|max)
        chunk_rows = _CHUNK_ROWS
    else:
        chunk_rows = block_rows                                # single chunk

    num_blocks = pl.cdiv(rows, block_rows)
    parallel_chunks = _NUM_PARALLEL if num_blocks >= _NUM_PARALLEL else 1
    blocks_per_chunk = pl.cdiv(num_blocks, parallel_chunks)
    covered_blocks = parallel_chunks * blocks_per_chunk
    any_ragged = covered_blocks * block_rows > rows

    # Clamp the logical block index for the (at most one) overflow block of an
    # uneven parallel split; its data is fully masked out in the kernel.
    if covered_blocks == num_blocks:
        def _in_idx(c, i):
            return (c * blocks_per_chunk + i, 0)
    else:
        _last_blk = num_blocks - 1

        def _in_idx(c, i):
            return (jnp.minimum(c * blocks_per_chunk + i, _last_blk), 0)

    kernel = functools.partial(
        _sse_partial_kernel,
        rows=rows, block_rows=block_rows, blocks_per_chunk=blocks_per_chunk,
        chunk_rows=chunk_rows, any_ragged=any_ragged)

    partials = pl.pallas_call(
        kernel,
        out_shape=jax.ShapeDtypeStruct((parallel_chunks, _ACC_ROWS, _LANES),
                                       jnp.float32),
        grid_spec=pltpu.PrefetchScalarGridSpec(
            num_scalar_prefetch=0,
            grid=(parallel_chunks, blocks_per_chunk),
            in_specs=[
                pl.BlockSpec((block_rows, _LANES), _in_idx),
                pl.BlockSpec((block_rows, _LANES), _in_idx),
            ],
            # Output block depends only on the parallel axis -> resident
            # accumulator across the inner ("arbitrary") reduction axis.
            out_specs=pl.BlockSpec((1, _ACC_ROWS, _LANES), lambda c, i: (c, 0, 0))),
        compiler_params=pltpu.CompilerParams(
            dimension_semantics=("parallel", "arbitrary"),
            vmem_limit_bytes=32 * 1024 * 1024),            # explicit, v7x-safe
    )(p2, t2)

    # Tiny scalar epilogue (combine per-core partials + PSNR + clip) in plain JAX.
    sse = jnp.sum(partials)
    mse = sse / jnp.float32(total)
    psnr_db = 10.0 * jnp.log10(jnp.float32(max_val * max_val) / mse)
    norm = (psnr_db - jnp.float32(min_db)) / jnp.float32(max_db - min_db)
    norm = jnp.clip(norm, 0.0, 1.0)
    return (1.0 - norm).astype(jnp.float32)


def _reference(pred, target, *, max_val=2.0, min_db=0.0, max_db=40.0):
    mse = jnp.mean((pred.astype(jnp.float32) - target.astype(jnp.float32)) ** 2)
    psnr_db = 10.0 * jnp.log10(jnp.float32(max_val * max_val) / mse)
    norm = jnp.clip((psnr_db - min_db) / (max_db - min_db), 0.0, 1.0)
    return 1.0 - norm


def _check(shape, dtype, key, atol):
    k_t, k_n = jax.random.split(key)
    target = jax.random.uniform(k_t, shape, jnp.float32, -1.0, 1.0)
    pred = target + 0.05 * jax.random.normal(k_n, shape, jnp.float32)
    pred = pred.astype(dtype)
    target = target.astype(dtype)
    loss = jax.block_until_ready(
        scaled_psnr_loss(pred, target, max_val=2.0, min_db=0.0, max_db=40.0))
    ref = _reference(pred, target, max_val=2.0, min_db=0.0, max_db=40.0)
    assert jnp.allclose(loss, ref, atol=atol, rtol=atol), (shape, dtype, loss, ref)


if __name__ == "__main__":
    key = jax.random.PRNGKey(0)
    keys = jax.random.split(key, 5)

    # Primary: NCHW f32, values in [-1, 1] (peak-to-peak 2.0 == max_val).
    _check((2, 4, 16, 16), jnp.float32, keys[0], atol=2e-5)
    # Native bf16 inputs (upcast happens per-chunk inside the kernel).
    _check((2, 4, 16, 16), jnp.bfloat16, keys[1], atol=2e-5)
    # Ragged element count (exercises the lane-tail pad fallback + row mask).
    _check((1, 3, 17, 19), jnp.float32, keys[2], atol=2e-5)
    # Rows not a multiple of the block height (exercises the masked branch).
    _check((1, 5, 16, 16), jnp.float32, keys[3], atol=2e-5)
    # Multi-block grid: 2-way parallel split + ragged last block per core.
    _check((2, 4, 300, 256), jnp.float32, keys[4], atol=1e-4)

    print("KERNEL_OK")
</pallas_src>

<mosaic_0001>
module attributes {stable_mosaic.version = 11 : i64} {
  func.func @_sse_partial_kernel(%arg0: i32, %arg1: i32, %arg2: memref<32x128xf32, #tpu.memory_space<vmem>>, %arg3: memref<32x128xf32, #tpu.memory_space<vmem>>, %arg4: memref<1x32x128xf32, #tpu.memory_space<vmem>>) attributes {dimension_semantics = [#tpu.dimension_semantics<parallel>, #tpu.dimension_semantics<arbitrary>], iteration_bounds = array<i64: 1, 1>, scalar_prefetch = 0 : i64, scratch_operands = 0 : i64, tpu.core_type = #tpu.core_type<tc>, window_params = [{transform_indices = @transform_0, window_bounds = array<i64: 32, 128>}, {transform_indices = @transform_1, window_bounds = array<i64: 32, 128>}, {transform_indices = @transform_2, window_bounds = array<i64: 1, 32, 128>}]} {
    %c0_i32 = arith.constant 0 : i32
    %0 = arith.cmpi eq, %arg1, %c0_i32 : i32
    %1 = arith.extui %0 : i1 to i32
    %c0_i32_0 = arith.constant 0 : i32
    %2 = arith.cmpi ne, %1, %c0_i32_0 : i32
    scf.if %2 {
      %cst = arith.constant 0.000000e+00 : f32
      %11 = vector.broadcast %cst : f32 to vector<1x32x128xf32>
      %c0 = arith.constant 0 : index
      %c0_4 = arith.constant 0 : index
      %c0_5 = arith.constant 0 : index
      %12 = vector.load %arg4[%c0, %c0_4, %c0_5] : memref<1x32x128xf32, #tpu.memory_space<vmem>>, vector<1x32x128xf32>
      tpu.vector_store %arg4[%c0, %c0_4, %c0_5], %11 {strides = array<i32>} : memref<1x32x128xf32, #tpu.memory_space<vmem>>, vector<1x32x128xf32>,
    } else {
    }
    %c1_i32 = arith.constant 1 : i32
    %3 = arith.muli %arg0, %c1_i32 : i32
    %4 = arith.addi %3, %arg1 : i32
    %c0_i32_1 = arith.constant 0 : i32
    %5 = arith.cmpi sge, %4, %c0_i32_1 : i32
    %true = arith.constant true
    %6 = arith.xori %5, %true : i1
    %7 = arith.extui %6 : i1 to i32
    %c0_i32_2 = arith.constant 0 : i32
    %8 = arith.cmpi ne, %7, %c0_i32_2 : i32
    scf.if %8 {
      %c0_i32_4 = arith.constant 0 : i32
      %c32_i32 = arith.constant 32 : i32
      %11 = arith.muli %c0_i32_4, %c32_i32 : i32
      %12 = tpu.assume_multiple %11, 32 : i32
      %13 = arith.index_cast %12 : i32 to index
      %c0 = arith.constant 0 : index
      %14 = vector.load %arg2[%13, %c0] : memref<32x128xf32, #tpu.memory_space<vmem>>, vector<32x128xf32>
      %15 = arith.index_cast %12 : i32 to index
      %c0_5 = arith.constant 0 : index
      %16 = vector.load %arg3[%15, %c0_5] : memref<32x128xf32, #tpu.memory_space<vmem>>, vector<32x128xf32>
      %17 = arith.subf %14, %16 : vector<32x128xf32>
      %18 = arith.mulf %17, %17 : vector<32x128xf32>
      %19 = vector.shape_cast %18 : vector<32x128xf32> to vector<1x32x128xf32>
      %cst = arith.constant dense<0.000000e+00> : vector<32x128xf32>
      %20 = vector.multi_reduction <add>, %19, %cst [0] : vector<1x32x128xf32> to vector<32x128xf32>
      %c0_6 = arith.constant 0 : index
      %c0_7 = arith.constant 0 : index
      %c0_8 = arith.constant 0 : index
      %21 = vector.load %arg4[%c0_6, %c0_7, %c0_8] : memref<1x32x128xf32, #tpu.memory_space<vmem>>, vector<1x32x128xf32>
      %22 = vector.shape_cast %20 : vector<32x128xf32> to vector<1x32x128xf32>
      %23 = arith.addf %21, %22 : vector<1x32x128xf32>
      %c0_9 = arith.constant 0 : index
      %c0_10 = arith.constant 0 : index
      %c0_11 = arith.constant 0 : index
      %24 = vector.load %arg4[%c0_9, %c0_10, %c0_11] : memref<1x32x128xf32, #tpu.memory_space<vmem>>, vector<1x32x128xf32>
      tpu.vector_store %arg4[%c0_9, %c0_10, %c0_11], %23 {strides = array<i32>} : memref<1x32x128xf32, #tpu.memory_space<vmem>>, vector<1x32x128xf32>,
      %c1_i32_12 = arith.constant 1 : i32
    } else {
    }
    %9 = arith.extui %5 : i1 to i32
    %c0_i32_3 = arith.constant 0 : i32
    %10 = arith.cmpi ne, %9, %c0_i32_3 : i32
    scf.if %10 {
      %c32_i32 = arith.constant 32 : i32
      %11 = arith.muli %4, %c32_i32 : i32
      %c16_i32 = arith.constant 16 : i32
      %12 = arith.subi %c16_i32, %11 : i32
      %c0_i32_4 = arith.constant 0 : i32
      %c32_i32_5 = arith.constant 32 : i32
      %13 = arith.muli %c0_i32_4, %c32_i32_5 : i32
      %14 = tpu.assume_multiple %13, 32 : i32
      %15 = arith.index_cast %14 : i32 to index
      %c0 = arith.constant 0 : index
      %16 = vector.load %arg2[%15, %c0] : memref<32x128xf32, #tpu.memory_space<vmem>>, vector<32x128xf32>
      %17 = arith.index_cast %14 : i32 to index
      %c0_6 = arith.constant 0 : index
      %18 = vector.load %arg3[%17, %c0_6] : memref<32x128xf32, #tpu.memory_space<vmem>>, vector<32x128xf32>
      %19 = arith.subf %16, %18 : vector<32x128xf32>
      %20 = arith.mulf %19, %19 : vector<32x128xf32>
      %21 = tpu.iota {dimensions = array<i32: 0>} : vector<32x128xi32>
      %22 = vector.broadcast %14 : i32 to vector<32x128xi32>
      %23 = arith.addi %22, %21 : vector<32x128xi32>
      %24 = vector.broadcast %12 : i32 to vector<32x128xi32>
      %25 = arith.cmpi slt, %23, %24 : vector<32x128xi32>
      %cst = arith.constant 0.000000e+00 : f32
      %26 = vector.broadcast %cst : f32 to vector<32x128xf32>
      %27 = arith.select %25, %20, %26 : vector<32x128xi1>, vector<32x128xf32>
      %28 = vector.shape_cast %27 : vector<32x128xf32> to vector<1x32x128xf32>
      %cst_7 = arith.constant dense<0.000000e+00> : vector<32x128xf32>
      %29 = vector.multi_reduction <add>, %28, %cst_7 [0] : vector<1x32x128xf32> to vector<32x128xf32>
      %c0_8 = arith.constant 0 : index
      %c0_9 = arith.constant 0 : index
      %c0_10 = arith.constant 0 : index
      %30 = vector.load %arg4[%c0_8, %c0_9, %c0_10] : memref<1x32x128xf32, #tpu.memory_space<vmem>>, vector<1x32x128xf32>
      %31 = vector.shape_cast %29 : vector<32x128xf32> to vector<1x32x128xf32>
      %32 = arith.addf %30, %31 : vector<1x32x128xf32>
      %c0_11 = arith.constant 0 : index
      %c0_12 = arith.constant 0 : index
      %c0_13 = arith.constant 0 : index
      %33 = vector.load %arg4[%c0_11, %c0_12, %c0_13] : memref<1x32x128xf32, #tpu.memory_space<vmem>>, vector<1x32x128xf32>
      tpu.vector_store %arg4[%c0_11, %c0_12, %c0_13], %32 {strides = array<i32>} : memref<1x32x128xf32, #tpu.memory_space<vmem>>, vector<1x32x128xf32>,
      %c1_i32_14 = arith.constant 1 : i32
    } else {
    }
    return
  }
  func.func @transform_0(%arg0: i32, %arg1: i32) -> (i32, i32) {
    %c1_i32 = arith.constant 1 : i32
    %0 = arith.muli %arg0, %c1_i32 : i32
    %1 = arith.addi %0, %arg1 : i32
    %c0_i32 = arith.constant 0 : i32
    %c0_i32_0 = arith.constant 0 : i32
    return %1, %c0_i32 : i32, i32
  }
  func.func @transform_1(%arg0: i32, %arg1: i32) -> (i32, i32) {
    %c1_i32 = arith.constant 1 : i32
    %0 = arith.muli %arg0, %c1_i32 : i32
    %1 = arith.addi %0, %arg1 : i32
    %c0_i32 = arith.constant 0 : i32
    %c0_i32_0 = arith.constant 0 : i32
    return %1, %c0_i32 : i32, i32
  }
  func.func @transform_2(%arg0: i32, %arg1: i32) -> (i32, i32, i32) {
    %c0_i32 = arith.constant 0 : i32
    %c0_i32_0 = arith.constant 0 : i32
    %c0_i32_1 = arith.constant 0 : i32
    return %arg0, %c0_i32, %c0_i32_0 : i32, i32, i32
  }
}

</mosaic_0001>

<llo_original>
// kernel: tpu_custom_call.1
$region0: #{tpu_custom_call.1}
  #allocation0 [shape = 'u32[]', space=smem, size = 0x4, offset = 0x4, fixed_abs, tag = 'smem constant byte address 0x4 - core index']
  #allocation1 [shape = 'u32[144,128]{1,0:T(1,128)}', space=vmem, size = 0x12000, scoped, tag = 'internal scratch']
  %s0 = inlined_call_operand.hbm [shape: f32[16,128], index: 0, kind: input, shape index: {}]
  %s1 = inlined_call_operand.hbm [shape: f32[16,128], index: 1, kind: input, shape index: {}]
  %s2 = inlined_call_operand.hbm [shape: f32[1,32,128], index: 2, kind: output, shape index: {}]
  %s3 = sld [smem:[#allocation0]]
  $region38: #{tpu_custom_call.1} parent=0
    _
  %s5 = ssub.s32 1, %s3
  %s6 = scalar_select 0, %s5, %s3
  $region1: #{tpu_custom_call.1} parent=0
    #allocation2 [shape = 'u8[16384]{0}', space=vmem, size = 0x4000, scoped, tag = 'input window, operand 0, single buffered']
    #allocation3 [shape = 's32[1]{0}', space=sflag, size = 0x4, scoped, tag = 'scoped memory for tpu_custom_call.1']
    #allocation4 [shape = 's32[1]{0}', space=sflag, size = 0x4, scoped, tag = 'scoped memory for tpu_custom_call.1']
    #allocation5 [shape = 'u8[16384]{0}', space=vmem, size = 0x4000, scoped, tag = 'input window, operand 1, single buffered']
    #allocation6 [shape = 's32[1]{0}', space=sflag, size = 0x4, scoped, tag = 'scoped memory for tpu_custom_call.1']
    #allocation7 [shape = 'u8[16384]{0}', space=vmem, size = 0x4000, scoped, tag = 'output window, operand 0, single buffered']
    %7 = vsyncpa [#allocation3], 0
    %8 = vsyncpa [#allocation6], 0
    %9 = vsyncpa [#allocation4], 0
    // Predicated region
    $region2: #{tpu_custom_call.1} parent=1 // pred_check
      _
    $region3: #{tpu_custom_call.1} parent=1 // pred_check_branch
      %11 = sbr.rel (0) target = $region5
    $region4: #{tpu_custom_call.1} parent=1 // pred_region
      %s12 = sadd.s32 0, 0
      %s13 = smul.u32 4, %s12
      %s14 = ssub.s32 2, %s13
      %s15 = smul.u32 128, %s14
      %s17 = ssub.s32 512, %s15
      %18 = vsyncadd [#allocation3], %s17
      %p19 = scmp.ne.s32.totalorder 0, %s15
      %s20 = smul.addr %s13, 128
      %s21 = scalar_lea.hbm %s0, %s20
      %s22 = smul.u32 8, %s14
      %s23 = sshll.u32 [#allocation2], 4
      %s24 = int_to_ptr.vmem [resolvable:$true] %s23
      %s25 = sshll.u32 %s22, 4
      %29 = dma.hbm_to_vmem [thread:$0]  (%p19), %s21, %s25, %s24, [#allocation3], 128, 128, 8
    $region5: #{tpu_custom_call.1} parent=1 // pred_fallthru
      _
    // Predicated region
    $region6: #{tpu_custom_call.1} parent=1 // pred_check
      _
    $region7: #{tpu_custom_call.1} parent=1 // pred_check_branch
      %31 = sbr.rel (0) target = $region9
    $region8: #{tpu_custom_call.1} parent=1 // pred_region
      %s32 = sadd.s32 0, 0
      %s33 = smul.u32 4, %s32
      %s34 = ssub.s32 2, %s33
      %s35 = smul.u32 128, %s34
      %s37 = ssub.s32 512, %s35
      %38 = vsyncadd [#allocation6], %s37
      %p39 = scmp.ne.s32.totalorder 0, %s35
      %s40 = smul.addr %s33, 128
      %s41 = scalar_lea.hbm %s1, %s40
      %s42 = smul.u32 8, %s34
      %s43 = sshll.u32 [#allocation5], 4
      %s44 = int_to_ptr.vmem [resolvable:$true] %s43
      %s45 = sshll.u32 %s42, 4
      %49 = dma.hbm_to_vmem [thread:$0]  (%p39), %s41, %s45, %s44, [#allocation6], 128, 128, 8
    $region9: #{tpu_custom_call.1} parent=1 // pred_fallthru
      _
    // Predicated region
    $region10: #{tpu_custom_call.1} parent=1 // pred_check
      _
    $region11: #{tpu_custom_call.1} parent=1 // pred_check_branch
      %51 = sbr.rel (0) target = $region13
    $region12: #{tpu_custom_call.1} parent=1 // pred_region
      %52 = dma.done [#allocation3], 512
    $region13: #{tpu_custom_call.1} parent=1 // pred_fallthru
      _
    // Predicated region
    $region14: #{tpu_custom_call.1} parent=1 // pred_check
      _
    $region15: #{tpu_custom_call.1} parent=1 // pred_check_branch
      %54 = sbr.rel (0) target = $region17
    $region16: #{tpu_custom_call.1} parent=1 // pred_region
      %55 = dma.done [#allocation6], 512
    $region17: #{tpu_custom_call.1} parent=1 // pred_fallthru
      _
    %s56 = sadd.s32 0, 0
    %s57 = smul.u32 4, %s56
    %s58 = ssub.s32 2, %s57
    %s59 = smul.u32 128, %s58
    %s60 = sadd.s32 0, 0
    %s61 = smul.u32 4, %s60
    %s62 = ssub.s32 2, %s61
    %s63 = smul.u32 128, %s62
    %p64 = scmp.eq.s32.totalorder 0, 0
    // Predicated region
    $region18: #{tpu_custom_call.1} parent=1 // pred_check
      %p65 = pneg %p64
    $region19: #{tpu_custom_call.1} parent=1 // pred_check_branch
      %67 = sbr.rel (%p65) target = $region21
    $region20: #{tpu_custom_call.1} parent=1 // pred_region
      %68 = vst [vmem:[#allocation7] sm:$0xff] 0.0
      %69 = vst [vmem:[#allocation7 + $0x8] sm:$0xff] 0.0
      %70 = vst [vmem:[#allocation7 + $0x10] sm:$0xff] 0.0
      %71 = vst [vmem:[#allocation7 + $0x18] sm:$0xff] 0.0
    $region21: #{tpu_custom_call.1} parent=1 // pred_fallthru
      _
    %s72 = sadd.s32 0, 0
    %p73 = scmp.ge.s32.totalorder %s72, 0
    %p74 = scmp.lt.s32.totalorder %s72, 0
    // Predicated region
    $region22: #{tpu_custom_call.1} parent=1 // pred_check
      %p75 = pneg %p74
    $region23: #{tpu_custom_call.1} parent=1 // pred_check_branch
      %77 = sbr.rel (%p75) target = $region25
    $region24: #{tpu_custom_call.1} parent=1 // pred_region
      %v78 = vld [vmem:[#allocation2] sm:$0xff]
      %v79 = vld [vmem:[#allocation2 + $0x8] sm:$0xff]
      %v80 = vld [vmem:[#allocation2 + $0x10] sm:$0xff]
      %v81 = vld [vmem:[#allocation2 + $0x18] sm:$0xff]
      %v82 = vld [vmem:[#allocation5] sm:$0xff]
      %v83 = vld [vmem:[#allocation5 + $0x8] sm:$0xff]
      %v84 = vld [vmem:[#allocation5 + $0x10] sm:$0xff]
      %v85 = vld [vmem:[#allocation5 + $0x18] sm:$0xff]
      %v86 = vsub.f32 %v78, %v82
      %v87 = vsub.f32 %v79, %v83
      %v88 = vsub.f32 %v80, %v84
      %v89 = vsub.f32 %v81, %v85
      %v90 = vmul.f32 %v86, %v86
      %v91 = vmul.f32 %v87, %v87
      %v92 = vmul.f32 %v88, %v88
      %v93 = vmul.f32 %v89, %v89
      %v94 = vadd.f32 %v90, 0.0
      %v95 = vadd.f32 %v91, 0.0
      %v96 = vadd.f32 %v92, 0.0
      %v97 = vadd.f32 %v93, 0.0
      %v98 = vld [vmem:[#allocation7] sm:$0xff]
      %v99 = vld [vmem:[#allocation7 + $0x8] sm:$0xff]
      %v100 = vld [vmem:[#allocation7 + $0x10] sm:$0xff]
      %v101 = vld [vmem:[#allocation7 + $0x18] sm:$0xff]
      %v102 = vadd.f32 %v98, %v94
      %v103 = vadd.f32 %v99, %v95
      %v104 = vadd.f32 %v100, %v96
      %v105 = vadd.f32 %v101, %v97
      %106 = vst [vmem:[#allocation7] sm:$0xff] %v102
      %107 = vst [vmem:[#allocation7 + $0x8] sm:$0xff] %v103
      %108 = vst [vmem:[#allocation7 + $0x10] sm:$0xff] %v104
      %109 = vst [vmem:[#allocation7 + $0x18] sm:$0xff] %v105
    $region25: #{tpu_custom_call.1} parent=1 // pred_fallthru
      _
    // Predicated region
    $region26: #{tpu_custom_call.1} parent=1 // pred_check
      %p110 = pneg %p73
    $region27: #{tpu_custom_call.1} parent=1 // pred_check_branch
      %112 = sbr.rel (%p110) target = $region29
    $region28: #{tpu_custom_call.1} parent=1 // pred_region
      %s113 = smul.u32 %s72, 32
      %s114 = ssub.s32 16, %s113
      %v115 = vld [vmem:[#allocation2] sm:$0xff]
      %v116 = vld [vmem:[#allocation2 + $0x8] sm:$0xff]
      %v117 = vld [vmem:[#allocation2 + $0x10] sm:$0xff]
      %v118 = vld [vmem:[#allocation2 + $0x18] sm:$0xff]
      %v119 = vld [vmem:[#allocation5] sm:$0xff]
      %v120 = vld [vmem:[#allocation5 + $0x8] sm:$0xff]
      %v121 = vld [vmem:[#allocation5 + $0x10] sm:$0xff]
      %v122 = vld [vmem:[#allocation5 + $0x18] sm:$0xff]
      %v123 = vsub.f32 %v115, %v119
      %v124 = vsub.f32 %v116, %v120
      %v125 = vsub.f32 %v117, %v121
      %v126 = vsub.f32 %v118, %v122
      %v127 = vmul.f32 %v123, %v123
      %v128 = vmul.f32 %v124, %v124
      %v129 = vmul.f32 %v125, %v125
      %v130 = vmul.f32 %v126, %v126
      %v131 = vlaneseq
      %v132 = vshrl.u32 %v131, 7
      %v133 = vadd.s32 %v132, 8
      %v134 = vadd.s32 %v132, 16
      %v135 = vadd.s32 %v132, 24
      %v136 = vstv 0
      %v137 = vadd.s32 %v136, %v132
      %v138 = vadd.s32 %v136, %v133
      %v139 = vadd.s32 %v136, %v134
      %v140 = vadd.s32 %v136, %v135
      %v141 = vstv %s114
      %vm142 = vcmp.lt.s32.totalorder %v137, %v141
      %vm143 = vcmp.lt.s32.totalorder %v138, %v141
      %vm144 = vcmp.lt.s32.totalorder %v139, %v141
      %vm145 = vcmp.lt.s32.totalorder %v140, %v141
      %v146 = vsel %vm142, %v127, 0.0
      %v147 = vsel %vm143, %v128, 0.0
      %v148 = vsel %vm144, %v129, 0.0
      %v149 = vsel %vm145, %v130, 0.0
      %v150 = vadd.f32 %v146, 0.0
      %v151 = vadd.f32 %v147, 0.0
      %v152 = vadd.f32 %v148, 0.0
      %v153 = vadd.f32 %v149, 0.0
      %v154 = vld [vmem:[#allocation7] sm:$0xff]
      %v155 = vld [vmem:[#allocation7 + $0x8] sm:$0xff]
      %v156 = vld [vmem:[#allocation7 + $0x10] sm:$0xff]
      %v157 = vld [vmem:[#allocation7 + $0x18] sm:$0xff]
      %v158 = vadd.f32 %v154, %v150
      %v159 = vadd.f32 %v155, %v151
      %v160 = vadd.f32 %v156, %v152
      %v161 = vadd.f32 %v157, %v153
      %162 = vst [vmem:[#allocation7] sm:$0xff] %v158
      %163 = vst [vmem:[#allocation7 + $0x8] sm:$0xff] %v159
      %164 = vst [vmem:[#allocation7 + $0x10] sm:$0xff] %v160
      %165 = vst [vmem:[#allocation7 + $0x18] sm:$0xff] %v161
    $region29: #{tpu_custom_call.1} parent=1 // pred_fallthru
      _
    // Predicated region
    $region30: #{tpu_custom_call.1} parent=1 // pred_check
      _
    $region31: #{tpu_custom_call.1} parent=1 // pred_check_branch
      %167 = sbr.rel (0) target = $region33
    $region32: #{tpu_custom_call.1} parent=1 // pred_region
      %s169 = ssub.s32 512, 512
      %170 = vsyncadd [#allocation4], %s169
      %s171 = sshll.u32 [#allocation7], 4
      %s172 = int_to_ptr.vmem [resolvable:$true] %s171
      %177 = dma.vmem_to_hbm [thread:$0]  %s172, 512, %s2, [#allocation4], 128, 128, 8
    $region33: #{tpu_custom_call.1} parent=1 // pred_fallthru
      _
    // Predicated region
    $region34: #{tpu_custom_call.1} parent=1 // pred_check
      _
    $region35: #{tpu_custom_call.1} parent=1 // pred_check_branch
      %179 = sbr.rel (0) target = $region37
    $region36: #{tpu_custom_call.1} parent=1 // pred_region
      %180 = dma.done [#allocation4], 512
    $region37: #{tpu_custom_call.1} parent=1 // pred_fallthru
      _
    %181 = vsyncpa [#allocation3], 1
    %182 = vsyncpa [#allocation6], 1
    %183 = vsyncpa [#allocation4], 1

</llo_original>
